<compile_context>
chip_gen: v6e
topology: v6e:2x2x1
jax: 0.10.0
libtpu: 0.0.40
codegen_flags: <defaults>
</compile_context>

<pallas_src>
import functools
import jax
import jax.numpy as jnp
from jax.experimental import pallas as pl
from jax.experimental.pallas import tpu as pltpu


# ---------------------------------------------------------------------------
# Kernels
# ---------------------------------------------------------------------------
def _copy_kernel(x_ref, o_ref):
    # Identity forward: straight VMEM tile copy (memory-bound).
    o_ref[...] = x_ref[...]


def _neg_scale_kernel(g_ref, o_ref, *, lam):
    # Backward: dx = -lambda * g   (lambda is a static Python float)
    o_ref[...] = (g_ref[...] * (-lam)).astype(o_ref.dtype)


# ---------------------------------------------------------------------------
# Layout / launch helpers
# ---------------------------------------------------------------------------
def _pick_2d_layout(total):
    """Choose (rows, lanes) so the lane dim is a large multiple of 128 and the
    sublane dim is >= 8 when possible (fully-filled vregs, unmasked stores)."""
    candidates = (2048, 1024, 512, 256, 128)
    for lanes in candidates:
        if total % lanes == 0 and total // lanes >= 8:
            return total // lanes, lanes
    for lanes in candidates:
        if total % lanes == 0:
            return total // lanes, lanes
    return 1, total  # ragged fallback: one full-extent block (always legal)


def _pick_row_tile(M, N, itemsize):
    """Row-tile size: multiple of 8, capped so double-buffered (in+out) blocks
    stay well under the scoped-VMEM default on every generation (incl. v7x).
    Prefers a divisor of M so no grid step needs masked partial stores."""
    bytes_per_row = max(N * itemsize, 1)
    cap = max(8, (4 * 1024 * 1024) // bytes_per_row)  # ~4 MiB per block
    if M % 8 != 0:
        return M  # full-extent block: always a legal block shape
    cap = min(M, (cap // 8) * 8)
    best = 8
    d = 8
    while d <= cap:
        if M % d == 0:
            best = d
        d += 8
    # Use the exact divisor if it's close to the budget; otherwise accept one
    # masked tail block in exchange for much larger (cheaper) tiles.
    if best >= max(8, cap // 2):
        return best
    return cap


def _run_elementwise(kernel_fn, x):
    """Run a unary elementwise Pallas kernel over x with a lane-dense 2-D tiling."""
    orig_shape = x.shape
    total = x.size
    if total == 0:
        return x

    M, N = _pick_2d_layout(total)
    x2 = x.reshape(M, N)
    tm = _pick_row_tile(M, N, x2.dtype.itemsize)
    grid = (pl.cdiv(M, tm),)

    out2 = pl.pallas_call(
        kernel_fn,
        out_shape=jax.ShapeDtypeStruct((M, N), x2.dtype),
        grid=grid,
        in_specs=[pl.BlockSpec((tm, N), lambda i: (i, 0))],
        out_specs=pl.BlockSpec((tm, N), lambda i: (i, 0)),
        compiler_params=pltpu.CompilerParams(
            dimension_semantics=("parallel",)),  # v7x: 2nd TC shares the grid
    )(x2)
    return out2.reshape(orig_shape)


# ---------------------------------------------------------------------------
# GradientReversal: identity forward, -lambda * grad backward
# ---------------------------------------------------------------------------
@functools.partial(jax.custom_vjp, nondiff_argnums=(1,))
def gradient_reversal(x, lambda_=1.0):
    return _run_elementwise(_copy_kernel, x)


def _grl_fwd(x, lambda_):
    return _run_elementwise(_copy_kernel, x), None


def _grl_bwd(lambda_, _residuals, g):
    dx = _run_elementwise(
        functools.partial(_neg_scale_kernel, lam=float(lambda_)), g)
    return (dx,)


gradient_reversal.defvjp(_grl_fwd, _grl_bwd)


# ---------------------------------------------------------------------------
# Self-test
# ---------------------------------------------------------------------------
if __name__ == "__main__":
    key = jax.random.PRNGKey(0)
    kx, kg = jax.random.split(key)

    x = jax.random.normal(kx, (2, 4, 16, 16), jnp.float32)
    g = jax.random.normal(kg, (2, 4, 16, 16), jnp.float32)
    lam = 0.75

    # Forward: identity
    y = jax.block_until_ready(gradient_reversal(x, lam))
    assert y.shape == x.shape
    assert jnp.allclose(y, x, atol=1e-6, rtol=1e-6)

    # Backward via vjp: dx = -lambda * g
    y2, vjp_fn = jax.vjp(lambda t: gradient_reversal(t, lam), x)
    (dx,) = vjp_fn(g)
    dx = jax.block_until_ready(dx)
    assert jnp.allclose(y2, x, atol=1e-6, rtol=1e-6)
    assert jnp.allclose(dx, -lam * g, atol=1e-5, rtol=1e-5)

    # Backward via grad of a scalar loss
    grad_fn = jax.grad(lambda t: jnp.sum(gradient_reversal(t, lam) * g))
    dx2 = jax.block_until_ready(grad_fn(x))
    assert jnp.allclose(dx2, -lam * g, atol=1e-5, rtol=1e-5)

    # Ragged / odd-sized input still works (full-extent block fallback)
    xr = jax.random.normal(kx, (3, 5, 7), jnp.float32)
    yr = jax.block_until_ready(gradient_reversal(xr, lam))
    assert jnp.allclose(yr, xr, atol=1e-6, rtol=1e-6)

    print("KERNEL_OK")
</pallas_src>

<mosaic_0001>
module attributes {stable_mosaic.version = 11 : i64} {
  func.func @_copy_kernel(%arg0: i32, %arg1: memref<8x256xf32, #tpu.memory_space<vmem>>, %arg2: memref<8x256xf32, #tpu.memory_space<vmem>>) attributes {dimension_semantics = [#tpu.dimension_semantics<parallel>], iteration_bounds = array<i64: 1>, scalar_prefetch = 0 : i64, scratch_operands = 0 : i64, tpu.core_type = #tpu.core_type<tc>, window_params = [{transform_indices = @transform_0, window_bounds = array<i64: 8, 256>}, {transform_indices = @transform_1, window_bounds = array<i64: 8, 256>}]} {
    %c0 = arith.constant 0 : index
    %c0_0 = arith.constant 0 : index
    %0 = vector.load %arg1[%c0, %c0_0] : memref<8x256xf32, #tpu.memory_space<vmem>>, vector<8x256xf32>
    %c0_1 = arith.constant 0 : index
    %c0_2 = arith.constant 0 : index
    %1 = vector.load %arg2[%c0_1, %c0_2] : memref<8x256xf32, #tpu.memory_space<vmem>>, vector<8x256xf32>
    tpu.vector_store %arg2[%c0_1, %c0_2], %0 {strides = array<i32>} : memref<8x256xf32, #tpu.memory_space<vmem>>, vector<8x256xf32>,
    return
  }
  func.func @transform_0(%arg0: i32) -> (i32, i32) {
    %c0_i32 = arith.constant 0 : i32
    %c0_i32_0 = arith.constant 0 : i32
    return %arg0, %c0_i32 : i32, i32
  }
  func.func @transform_1(%arg0: i32) -> (i32, i32) {
    %c0_i32 = arith.constant 0 : i32
    %c0_i32_0 = arith.constant 0 : i32
    return %arg0, %c0_i32 : i32, i32
  }
}

</mosaic_0001>

<llo_original>
// kernel: tpu_custom_call.1
$region0: #{tpu_custom_call.1}
  #allocation0 [shape = 'u32[]', space=smem, size = 0x4, offset = 0x4, fixed_abs, tag = 'smem constant byte address 0x4 - core index']
  #allocation1 [shape = 'u32[144,128]{1,0:T(1,128)}', space=vmem, size = 0x12000, scoped, tag = 'internal scratch']
  %s0 = inlined_call_operand.hbm [shape: f32[8,256], index: 0, kind: input, shape index: {}]
  %s1 = inlined_call_operand.hbm [shape: f32[8,256], index: 1, kind: output, shape index: {}]
  %s2 = sld [smem:[#allocation0]]
  $region18: #{tpu_custom_call.1} parent=0
    _
  %s4 = ssub.s32 1, %s2
  %s5 = scalar_select 0, %s4, %s2
  $region1: #{tpu_custom_call.1} parent=0
    #allocation2 [shape = 'u8[8192]{0}', space=vmem, size = 0x2000, scoped, tag = 'input window, operand 0, single buffered']
    #allocation3 [shape = 's32[1]{0}', space=sflag, size = 0x4, scoped, tag = 'scoped memory for tpu_custom_call.1']
    #allocation4 [shape = 's32[1]{0}', space=sflag, size = 0x4, scoped, tag = 'scoped memory for tpu_custom_call.1']
    #allocation5 [shape = 'u8[8192]{0}', space=vmem, size = 0x2000, scoped, tag = 'output window, operand 0, single buffered']
    %6 = vsyncpa [#allocation3], 0
    %7 = vsyncpa [#allocation4], 0
    // Predicated region
    $region2: #{tpu_custom_call.1} parent=1 // pred_check
      _
    $region3: #{tpu_custom_call.1} parent=1 // pred_check_branch
      %9 = sbr.rel (0) target = $region5
    $region4: #{tpu_custom_call.1} parent=1 // pred_region
      %s11 = ssub.s32 256, 256
      %12 = vsyncadd [#allocation3], %s11
      %s14 = sshll.u32 [#allocation2], 4
      %s15 = int_to_ptr.vmem [resolvable:$true] %s14
      %17 = dma.hbm_to_vmem [thread:$0]  %s0, 256, %s15, [#allocation3]
    $region5: #{tpu_custom_call.1} parent=1 // pred_fallthru
      _
    // Predicated region
    $region6: #{tpu_custom_call.1} parent=1 // pred_check
      _
    $region7: #{tpu_custom_call.1} parent=1 // pred_check_branch
      %19 = sbr.rel (0) target = $region9
    $region8: #{tpu_custom_call.1} parent=1 // pred_region
      %20 = dma.done [#allocation3], 256
    $region9: #{tpu_custom_call.1} parent=1 // pred_fallthru
      _
    %v21 = vld [vmem:[#allocation2] sm:$0xff]
    %v22 = vld [vmem:[#allocation2 + $0x8] sm:$0xff]
    %23 = vst [vmem:[#allocation5] sm:$0xff] %v21
    %24 = vst [vmem:[#allocation5 + $0x8] sm:$0xff] %v22
    // Predicated region
    $region10: #{tpu_custom_call.1} parent=1 // pred_check
      _
    $region11: #{tpu_custom_call.1} parent=1 // pred_check_branch
      %26 = sbr.rel (0) target = $region13
    $region12: #{tpu_custom_call.1} parent=1 // pred_region
      %s28 = ssub.s32 256, 256
      %29 = vsyncadd [#allocation4], %s28
      %s31 = sshll.u32 [#allocation5], 4
      %s32 = int_to_ptr.vmem [resolvable:$true] %s31
      %34 = dma.vmem_to_hbm [thread:$0]  %s32, 256, %s1, [#allocation4]
    $region13: #{tpu_custom_call.1} parent=1 // pred_fallthru
      _
    // Predicated region
    $region14: #{tpu_custom_call.1} parent=1 // pred_check
      _
    $region15: #{tpu_custom_call.1} parent=1 // pred_check_branch
      %36 = sbr.rel (0) target = $region17
    $region16: #{tpu_custom_call.1} parent=1 // pred_region
      %37 = dma.done [#allocation4], 256
    $region17: #{tpu_custom_call.1} parent=1 // pred_fallthru
      _
    %38 = vsyncpa [#allocation3], 1
    %39 = vsyncpa [#allocation4], 1

</llo_original>
